<compile_context>
chip_gen: v6e
topology: v6e:2x2x1
jax: 0.10.0
libtpu: 0.0.40
codegen_flags: <defaults>
</compile_context>

<pallas_src>
import functools

import jax
import jax.numpy as jnp
from jax.experimental import pallas as pl
from jax.experimental.pallas import tpu as pltpu


def _feature_downscale_kernel(p_ref, w_ref, b_ref, g_ref, beta_ref, o_ref):
    # p_ref:    (K, T)   transposed patches for one spatial tile (K = C*ds*ds)
    # w_ref:    (C, K)   conv weight (flattened OIHW -> (C_out, K))
    # b_ref:    (C, 1)   conv bias
    # g_ref:    (C, 1)   LayerNorm gamma
    # beta_ref: (C, 1)   LayerNorm beta
    # o_ref:    (C, T)   output slab (channels on sublanes, spatial on lanes)

    # Strided conv == patch matmul.  Operands stay in their native dtype so the
    # MXU uses its bf16/native path; accumulation is f32.
    y = jnp.dot(w_ref[...], p_ref[...], preferred_element_type=jnp.float32)
    y = y + b_ref[...].astype(jnp.float32)

    # LayerNorm over the channel dim (axis 0), eps matching nn.LayerNorm default.
    mean = jnp.mean(y, axis=0, keepdims=True)
    diff = y - mean
    var = jnp.mean(diff * diff, axis=0, keepdims=True)
    y_n = diff * jax.lax.rsqrt(var + 1e-5)

    gamma = g_ref[...].astype(jnp.float32)
    beta = beta_ref[...].astype(jnp.float32)
    o_ref[...] = (y_n * gamma + beta).astype(o_ref.dtype)


def _pick_hw_tile(hw, k, c, itemsize, *, max_lanes=2048, budget_bytes=8 << 20):
    """Pick a spatial (lane) tile: full extent for small images, else the largest
    multiple of 128 that divides hw and keeps the double-buffered in+out tiles
    inside a conservative VMEM budget (valid on v5e/v6e/v7x)."""
    # Cap by VMEM budget: 2 * hw_tile * (K + C) * itemsize  <= budget
    cap = budget_bytes // max(1, 2 * (k + c) * itemsize)
    cap = min(max_lanes, cap)
    if hw <= max(cap, 128):
        return hw                      # full extent (always a legal block dim)
    cap = max(128, (cap // 128) * 128)
    t = cap
    while t >= 128:
        if hw % t == 0:
            return t
        t -= 128
    # No 128-multiple divisor found: fall back to the full extent.
    return hw


def feature_downscale(x, conv_w, conv_b, ln_g, ln_b, down_scale):
    """x: (N, C, H, W) NCHW, like the PyTorch module.  Returns (N, C, Ho, Wo)."""
    N, C, H, W = x.shape
    ds = down_scale
    Ho, Wo = H // ds, W // ds
    HW = Ho * Wo
    K = C * ds * ds

    # Unfold NCHW into channel-major patches (N, K, Ho*Wo); K ordered (c, dh, dw)
    # to match conv_w.reshape(C, K).
    patches_t = (
        x.reshape(N, C, Ho, ds, Wo, ds)
        .transpose(0, 1, 3, 5, 2, 4)     # (N, C, ds, ds, Ho, Wo)
        .reshape(N, K, HW)
    )

    w_mat = conv_w.reshape(C, K)         # (C, K)
    b2 = conv_b.reshape(C, 1)
    g2 = ln_g.reshape(C, 1)
    beta2 = ln_b.reshape(C, 1)

    itemsize = jnp.dtype(x.dtype).itemsize
    hw_tile = _pick_hw_tile(HW, K, C, itemsize)
    assert HW % hw_tile == 0
    grid = (N, HW // hw_tile)

    # Explicit scoped-VMEM limit derived from the double-buffered working set
    # (input + output tiles are double-buffered; weight/params are grid-invariant
    # so they are fetched once even though a second buffer is allocated).
    blk_in = K * hw_tile * itemsize
    blk_out = C * hw_tile * itemsize
    params = (K * C + 3 * C) * itemsize
    working = 2 * (blk_in + blk_out) + 2 * params + (1 << 20)
    vmem_limit = int(min(max(2 * working, 16 << 20), 32 << 20))

    out = pl.pallas_call(
        _feature_downscale_kernel,
        out_shape=jax.ShapeDtypeStruct((N, C, HW), x.dtype),
        grid_spec=pltpu.PrefetchScalarGridSpec(
            num_scalar_prefetch=0,
            grid=grid,
            in_specs=[
                pl.BlockSpec((None, K, hw_tile), lambda n, t: (n, 0, t)),
                pl.BlockSpec((C, K), lambda n, t: (0, 0)),
                pl.BlockSpec((C, 1), lambda n, t: (0, 0)),
                pl.BlockSpec((C, 1), lambda n, t: (0, 0)),
                pl.BlockSpec((C, 1), lambda n, t: (0, 0)),
            ],
            out_specs=pl.BlockSpec((None, C, hw_tile), lambda n, t: (n, 0, t)),
        ),
        compiler_params=pltpu.CompilerParams(
            dimension_semantics=("parallel", "parallel"),
            vmem_limit_bytes=vmem_limit,
        ),
    )(patches_t, w_mat, b2, g2, beta2)

    # (N, C, Ho*Wo) -> (N, C, Ho, Wo): pure reshape, no transpose / extra HBM pass.
    return out.reshape(N, C, Ho, Wo)


def _reference(x, conv_w, conv_b, ln_g, ln_b, down_scale):
    """Pure-JAX reference mirroring the PyTorch forward."""
    y = jax.lax.conv_general_dilated(
        x, conv_w,
        window_strides=(down_scale, down_scale),
        padding="VALID",
        dimension_numbers=("NCHW", "OIHW", "NCHW"),
    ) + conv_b.reshape(1, -1, 1, 1)
    y = y.transpose(0, 2, 3, 1)                 # NHWC
    mean = jnp.mean(y, axis=-1, keepdims=True)
    var = jnp.mean((y - mean) ** 2, axis=-1, keepdims=True)
    y = (y - mean) / jnp.sqrt(var + 1e-5) * ln_g + ln_b
    return y.transpose(0, 3, 1, 2)              # NCHW


if __name__ == "__main__":
    # Small shapes consistent with the module: batch=2, in_c=4, H=W=16, down_scale=2
    N, C, H, W = 2, 4, 16, 16
    ds = 2

    key = jax.random.PRNGKey(0)
    kx, kw, kb = jax.random.split(key, 3)

    x = jax.random.normal(kx, (N, C, H, W), dtype=jnp.float32)

    # Deterministic parameter init (synthetic, not a checkpoint load)
    fan_in = C * ds * ds
    bound = 1.0 / jnp.sqrt(fan_in)
    conv_w = jax.random.uniform(kw, (C, C, ds, ds), jnp.float32, -bound, bound)
    conv_b = jax.random.uniform(kb, (C,), jnp.float32, -bound, bound)
    ln_g = jnp.ones((C,), jnp.float32)
    ln_b = jnp.zeros((C,), jnp.float32)

    fn = jax.jit(functools.partial(feature_downscale, down_scale=ds))
    out = fn(x, conv_w, conv_b, ln_g, ln_b)
    out = jax.block_until_ready(out)

    ref = _reference(x, conv_w, conv_b, ln_g, ln_b, ds)
    assert out.shape == (N, C, H // ds, W // ds)
    assert jnp.allclose(out, ref, atol=1e-4, rtol=1e-4), "mismatch vs reference"

    print("KERNEL_OK")
</pallas_src>

<mosaic_0001>
module attributes {stable_mosaic.version = 11 : i64} {
  func.func @_feature_downscale_kernel(%arg0: i32, %arg1: i32, %arg2: memref<1x16x64xf32, #tpu.memory_space<vmem>>, %arg3: memref<4x16xf32, #tpu.memory_space<vmem>>, %arg4: memref<4x1xf32, #tpu.memory_space<vmem>>, %arg5: memref<4x1xf32, #tpu.memory_space<vmem>>, %arg6: memref<4x1xf32, #tpu.memory_space<vmem>>, %arg7: memref<1x4x64xf32, #tpu.memory_space<vmem>>) attributes {dimension_semantics = [#tpu.dimension_semantics<parallel>, #tpu.dimension_semantics<parallel>], iteration_bounds = array<i64: 2, 1>, scalar_prefetch = 0 : i64, scratch_operands = 0 : i64, tpu.core_type = #tpu.core_type<tc>, window_params = [{transform_indices = @transform_0, window_bounds = array<i64: 1, 16, 64>}, {pipeline_mode = #tpu.pipeline_mode<synchronous>, transform_indices = @transform_1, window_bounds = array<i64: 4, 16>}, {pipeline_mode = #tpu.pipeline_mode<synchronous>, transform_indices = @transform_2, window_bounds = array<i64: 4, 1>}, {pipeline_mode = #tpu.pipeline_mode<synchronous>, transform_indices = @transform_3, window_bounds = array<i64: 4, 1>}, {pipeline_mode = #tpu.pipeline_mode<synchronous>, transform_indices = @transform_4, window_bounds = array<i64: 4, 1>}, {transform_indices = @transform_5, window_bounds = array<i64: 1, 4, 64>}]} {
    %c0 = arith.constant 0 : index
    %c0_0 = arith.constant 0 : index
    %0 = vector.load %arg3[%c0, %c0_0] : memref<4x16xf32, #tpu.memory_space<vmem>>, vector<4x16xf32>
    %c0_1 = arith.constant 0 : index
    %c0_2 = arith.constant 0 : index
    %c0_3 = arith.constant 0 : index
    %1 = vector.load %arg2[%c0_1, %c0_2, %c0_3] : memref<1x16x64xf32, #tpu.memory_space<vmem>>, vector<1x16x64xf32>
    %2 = vector.shape_cast %1 : vector<1x16x64xf32> to vector<16x64xf32>
    %cst = arith.constant dense<0.000000e+00> : vector<4x64xf32>
    %3 = tpu.matmul %0, %2, %cst {dimension_numbers = #tpu.dot_dimension_numbers<[1], [0], [0], [1], [0, 0, 1, 1], [], []>} : vector<4x16xf32>, vector<16x64xf32>, vector<4x64xf32> -> vector<4x64xf32>
    %c0_4 = arith.constant 0 : index
    %c0_5 = arith.constant 0 : index
    %4 = vector.load %arg4[%c0_4, %c0_5] : memref<4x1xf32, #tpu.memory_space<vmem>>, vector<4x1xf32>
    %5 = vector.broadcast %4 : vector<4x1xf32> to vector<4x64xf32>
    %6 = arith.addf %3, %5 : vector<4x64xf32>
    %cst_6 = arith.constant dense<0.000000e+00> : vector<64xf32>
    %7 = vector.multi_reduction <add>, %6, %cst_6 [0] : vector<4x64xf32> to vector<64xf32>
    %8 = vector.shape_cast %7 : vector<64xf32> to vector<1x64xf32>
    %cst_7 = arith.constant 4.000000e+00 : f32
    %9 = vector.broadcast %cst_7 : f32 to vector<1x64xf32>
    %10 = arith.divf %8, %9 : vector<1x64xf32>
    %11 = vector.broadcast %10 : vector<1x64xf32> to vector<4x64xf32>
    %12 = arith.subf %6, %11 : vector<4x64xf32>
    %13 = arith.mulf %12, %12 : vector<4x64xf32>
    %cst_8 = arith.constant dense<0.000000e+00> : vector<64xf32>
    %14 = vector.multi_reduction <add>, %13, %cst_8 [0] : vector<4x64xf32> to vector<64xf32>
    %15 = vector.shape_cast %14 : vector<64xf32> to vector<1x64xf32>
    %cst_9 = arith.constant 4.000000e+00 : f32
    %16 = vector.broadcast %cst_9 : f32 to vector<1x64xf32>
    %17 = arith.divf %15, %16 : vector<1x64xf32>
    %cst_10 = arith.constant 9.99999974E-6 : f32
    %18 = vector.broadcast %cst_10 : f32 to vector<1x64xf32>
    %19 = arith.addf %17, %18 : vector<1x64xf32>
    %20 = math.rsqrt %19 : vector<1x64xf32>
    %21 = vector.broadcast %20 : vector<1x64xf32> to vector<4x64xf32>
    %22 = arith.mulf %12, %21 : vector<4x64xf32>
    %c0_11 = arith.constant 0 : index
    %c0_12 = arith.constant 0 : index
    %23 = vector.load %arg5[%c0_11, %c0_12] : memref<4x1xf32, #tpu.memory_space<vmem>>, vector<4x1xf32>
    %c0_13 = arith.constant 0 : index
    %c0_14 = arith.constant 0 : index
    %24 = vector.load %arg6[%c0_13, %c0_14] : memref<4x1xf32, #tpu.memory_space<vmem>>, vector<4x1xf32>
    %25 = vector.broadcast %23 : vector<4x1xf32> to vector<4x64xf32>
    %26 = arith.mulf %22, %25 : vector<4x64xf32>
    %27 = vector.broadcast %24 : vector<4x1xf32> to vector<4x64xf32>
    %28 = arith.addf %26, %27 : vector<4x64xf32>
    %c0_15 = arith.constant 0 : index
    %c0_16 = arith.constant 0 : index
    %c0_17 = arith.constant 0 : index
    %29 = vector.load %arg7[%c0_15, %c0_16, %c0_17] : memref<1x4x64xf32, #tpu.memory_space<vmem>>, vector<1x4x64xf32>
    %30 = vector.shape_cast %29 : vector<1x4x64xf32> to vector<4x64xf32>
    %31 = vector.shape_cast %28 : vector<4x64xf32> to vector<1x4x64xf32>
    tpu.vector_store %arg7[%c0_15, %c0_16, %c0_17], %31 {strides = array<i32>} : memref<1x4x64xf32, #tpu.memory_space<vmem>>, vector<1x4x64xf32>,
    return
  }
  func.func @transform_0(%arg0: i32, %arg1: i32) -> (i32, i32, i32) {
    %c0_i32 = arith.constant 0 : i32
    %c0_i32_0 = arith.constant 0 : i32
    return %arg0, %c0_i32, %arg1 : i32, i32, i32
  }
  func.func @transform_1(%arg0: i32, %arg1: i32) -> (i32, i32) {
    %c0_i32 = arith.constant 0 : i32
    %c0_i32_0 = arith.constant 0 : i32
    %c0_i32_1 = arith.constant 0 : i32
    return %c0_i32, %c0_i32_0 : i32, i32
  }
  func.func @transform_2(%arg0: i32, %arg1: i32) -> (i32, i32) {
    %c0_i32 = arith.constant 0 : i32
    %c0_i32_0 = arith.constant 0 : i32
    %c0_i32_1 = arith.constant 0 : i32
    return %c0_i32, %c0_i32_0 : i32, i32
  }
  func.func @transform_3(%arg0: i32, %arg1: i32) -> (i32, i32) {
    %c0_i32 = arith.constant 0 : i32
    %c0_i32_0 = arith.constant 0 : i32
    %c0_i32_1 = arith.constant 0 : i32
    return %c0_i32, %c0_i32_0 : i32, i32
  }
  func.func @transform_4(%arg0: i32, %arg1: i32) -> (i32, i32) {
    %c0_i32 = arith.constant 0 : i32
    %c0_i32_0 = arith.constant 0 : i32
    %c0_i32_1 = arith.constant 0 : i32
    return %c0_i32, %c0_i32_0 : i32, i32
  }
  func.func @transform_5(%arg0: i32, %arg1: i32) -> (i32, i32, i32) {
    %c0_i32 = arith.constant 0 : i32
    %c0_i32_0 = arith.constant 0 : i32
    return %arg0, %c0_i32, %arg1 : i32, i32, i32
  }
}

</mosaic_0001>

<llo_original>
// kernel: feature_downscale.1
$region0: #{feature_downscale.1}
  #allocation0 [shape = 'u32[]', space=smem, size = 0x4, offset = 0x4, fixed_abs, tag = 'smem constant byte address 0x4 - core index']
  #allocation1 [shape = 'u32[144,128]{1,0:T(1,128)}', space=vmem, size = 0x12000, scoped, tag = 'internal scratch']
  %s0 = inlined_call_operand.vmem [shape: f32[2,16,64], index: 0, kind: input, shape index: {}]
  %s1 = inlined_call_operand.vmem [shape: f32[4,16], index: 1, kind: input, shape index: {}]
  %s2 = inlined_call_operand.vmem [shape: f32[4,1], index: 2, kind: input, shape index: {}]
  %s3 = inlined_call_operand.vmem [shape: f32[4,1], index: 3, kind: input, shape index: {}]
  %s4 = inlined_call_operand.vmem [shape: f32[4,1], index: 4, kind: input, shape index: {}]
  %s5 = inlined_call_operand.vmem [shape: f32[2,4,64], index: 5, kind: output, shape index: {}]
  %s6 = sld [smem:[#allocation0]]
  $region53: #{feature_downscale.1} parent=0
    _
  %s8 = ssub.s32 1, %s6
  %s9 = scalar_select 0, %s8, %s6
  loop: start=0, step=1, limit=4
  $region2: #{feature_downscale.1} parent=0 // loop_pre_header
    _
  $region3: #{feature_downscale.1} parent=0 // loop_header
    %s11 = sphi 0, %s15
    %p12 = scmp.ge.s32.totalorder %s11, 4
    %s18 = sphi 0, %s30
    %s19 = sphi 0, %s26
    %s20 = sphi 0, %s18
    %s21 = sphi 0, %s19
    %s22 = sphi 0, %s20
    %s23 = sphi 0, %s21
    %s35 = sphi 0, %s37
    %s38 = sphi 0, %s35
    %s39 = sphi 0, %s38
    %s55 = sphi 0, %s39
    %s59 = sphi 0, %s59
    %s61 = sphi 0, %s59
    %s62 = sphi 0, %s61
    %s76 = sphi 0, %s62
    %s80 = sphi 0, %s80
    %s82 = sphi 0, %s80
    %s83 = sphi 0, %s82
    %s97 = sphi 0, %s83
    %s101 = sphi 0, %s101
    %s103 = sphi 0, %s101
    %s104 = sphi 0, %s103
    %s118 = sphi 0, %s104
    %s122 = sphi 0, %s122
    %s124 = sphi 0, %s122
    %s125 = sphi 0, %s124
    %s139 = sphi 0, %s125
    %s147 = sphi 0, %s149
    %s150 = sphi 0, %s147
    %s151 = sphi 0, %s150
    %s167 = sphi 0, %s151
  $region4: #{feature_downscale.1} parent=0 // loop_header_branch
    %14 = sbr.rel (%p12) target = $region8
  $region5: #{feature_downscale.1} parent=0 // loop_body
    %s16 = ssub.s32 %s11, 1
    %s17 = ssub.s32 %s11, 2
    %s24 = sadd.s32 1, %s19
    %p25 = scmp.ge.s32.totalorder %s24, 1
    %s26 = scalar_select %p25, 0, %s24
    %s27 = sadd.s32 1, %s18
    %s28 = scalar_select %p25, %s27, %s18
    %p29 = scmp.ge.s32.totalorder %s28, 2
    %s30 = scalar_select %p29, 0, %s28
    %s31 = ssub.s32 %s18, %s30
    %s32 = ssub.s32 %s19, %s26
    %s33 = sor.u32 %s31, %s32
    %p34 = scmp.eq.s32.totalorder %s33, 0
    %s36 = sadd.s32 %s35, 1
    %s37 = scalar_select %p34, %s35, %s36
    %p40 = pneg %p34
    %p41 = scmp.eq.s32.totalorder %s11, 1
    %p42 = por %p40, %p41
    %p43 = scmp.ne.s32.totalorder %s35, %s38
    %p44 = scmp.eq.s32.totalorder %s11, 0
    %p45 = por %p43, %p44
    %p46 = scmp.ne.s32.totalorder %s35, %s38
    %p47 = scmp.eq.s32.totalorder %s16, 1
    %p48 = por %p46, %p47
    %p49 = scmp.ne.s32.totalorder %s38, %s39
    %p50 = scmp.eq.s32.totalorder %s16, 0
    %p51 = por %p49, %p50
    %p52 = scmp.ne.s32.totalorder %s38, %s39
    %p53 = scmp.eq.s32.totalorder %s17, 1
    %p54 = por %p52, %p53
    %p56 = scmp.ne.s32.totalorder %s39, %s55
    %p57 = scmp.eq.s32.totalorder %s17, 0
    %p58 = por %p56, %p57
    %s60 = sadd.s32 %s59, 1
    %p63 = scmp.eq.s32.totalorder %s11, 1
    %p64 = scmp.ne.s32.totalorder %s59, %s61
    %p65 = scmp.eq.s32.totalorder %s11, 0
    %p66 = por %p64, %p65
    %p67 = scmp.ne.s32.totalorder %s59, %s61
    %p68 = scmp.eq.s32.totalorder %s16, 1
    %p69 = por %p67, %p68
    %p70 = scmp.ne.s32.totalorder %s61, %s62
    %p71 = scmp.eq.s32.totalorder %s16, 0
    %p72 = por %p70, %p71
    %p73 = scmp.ne.s32.totalorder %s61, %s62
    %p74 = scmp.eq.s32.totalorder %s17, 1
    %p75 = por %p73, %p74
    %p77 = scmp.ne.s32.totalorder %s62, %s76
    %p78 = scmp.eq.s32.totalorder %s17, 0
    %p79 = por %p77, %p78
    %s81 = sadd.s32 %s80, 1
    %p84 = scmp.eq.s32.totalorder %s11, 1
    %p85 = scmp.ne.s32.totalorder %s80, %s82
    %p86 = scmp.eq.s32.totalorder %s11, 0
    %p87 = por %p85, %p86
    %p88 = scmp.ne.s32.totalorder %s80, %s82
    %p89 = scmp.eq.s32.totalorder %s16, 1
    %p90 = por %p88, %p89
    %p91 = scmp.ne.s32.totalorder %s82, %s83
    %p92 = scmp.eq.s32.totalorder %s16, 0
    %p93 = por %p91, %p92
    %p94 = scmp.ne.s32.totalorder %s82, %s83
    %p95 = scmp.eq.s32.totalorder %s17, 1
    %p96 = por %p94, %p95
    %p98 = scmp.ne.s32.totalorder %s83, %s97
    %p99 = scmp.eq.s32.totalorder %s17, 0
    %p100 = por %p98, %p99
    %s102 = sadd.s32 %s101, 1
    %p105 = scmp.eq.s32.totalorder %s11, 1
    %p106 = scmp.ne.s32.totalorder %s101, %s103
    %p107 = scmp.eq.s32.totalorder %s11, 0
    %p108 = por %p106, %p107
    %p109 = scmp.ne.s32.totalorder %s101, %s103
    %p110 = scmp.eq.s32.totalorder %s16, 1
    %p111 = por %p109, %p110
    %p112 = scmp.ne.s32.totalorder %s103, %s104
    %p113 = scmp.eq.s32.totalorder %s16, 0
    %p114 = por %p112, %p113
    %p115 = scmp.ne.s32.totalorder %s103, %s104
    %p116 = scmp.eq.s32.totalorder %s17, 1
    %p117 = por %p115, %p116
    %p119 = scmp.ne.s32.totalorder %s104, %s118
    %p120 = scmp.eq.s32.totalorder %s17, 0
    %p121 = por %p119, %p120
    %s123 = sadd.s32 %s122, 1
    %p126 = scmp.eq.s32.totalorder %s11, 1
    %p127 = scmp.ne.s32.totalorder %s122, %s124
    %p128 = scmp.eq.s32.totalorder %s11, 0
    %p129 = por %p127, %p128
    %p130 = scmp.ne.s32.totalorder %s122, %s124
    %p131 = scmp.eq.s32.totalorder %s16, 1
    %p132 = por %p130, %p131
    %p133 = scmp.ne.s32.totalorder %s124, %s125
    %p134 = scmp.eq.s32.totalorder %s16, 0
    %p135 = por %p133, %p134
    %p136 = scmp.ne.s32.totalorder %s124, %s125
    %p137 = scmp.eq.s32.totalorder %s17, 1
    %p138 = por %p136, %p137
    %p140 = scmp.ne.s32.totalorder %s125, %s139
    %p141 = scmp.eq.s32.totalorder %s17, 0
    %p142 = por %p140, %p141
    %s143 = ssub.s32 %s18, %s30
    %s144 = ssub.s32 %s19, %s26
    %s145 = sor.u32 %s143, %s144
    %p146 = scmp.eq.s32.totalorder %s145, 0
    %s148 = sadd.s32 %s147, 1
    %s149 = scalar_select %p146, %s147, %s148
    %p152 = pneg %p146
    %p153 = scmp.eq.s32.totalorder %s11, 1
    %p154 = por %p152, %p153
    %p155 = scmp.ne.s32.totalorder %s147, %s150
    %p156 = scmp.eq.s32.totalorder %s11, 0
    %p157 = por %p155, %p156
    %p158 = scmp.ne.s32.totalorder %s147, %s150
    %p159 = scmp.eq.s32.totalorder %s16, 1
    %p160 = por %p158, %p159
    %p161 = scmp.ne.s32.totalorder %s150, %s151
    %p162 = scmp.eq.s32.totalorder %s16, 0
    %p163 = por %p161, %p162
    %p164 = scmp.ne.s32.totalorder %s150, %s151
    %p165 = scmp.eq.s32.totalorder %s17, 1
    %p166 = por %p164, %p165
    %p168 = scmp.ne.s32.totalorder %s151, %s167
    %p169 = scmp.eq.s32.totalorder %s17, 0
    %p170 = por %p168, %p169
    %p171 = scmp.le.s32.totalorder 1, %s11
    %p172 = scmp.lt.s32.totalorder %s11, 3
    %p173 = pnand %p171, %p172
    %p174 = pneg %p173
    // Predicated region
    $region9: #{feature_downscale.1} parent=5 // pred_check
      _
    $region10: #{feature_downscale.1} parent=5 // pred_check_branch
      %176 = sbr.rel (%p173) target = $region12
    $region11: #{feature_downscale.1} parent=5 // pred_region
      %s177 = ssub.s32 %s11, 1
      // Predicated region
      $region13: #{feature_downscale.1} parent=11 // pred_check
        %p178 = pneg %p72
      $region14: #{feature_downscale.1} parent=11 // pred_check_branch
        %180 = sbr.rel (%p178) target = $region16
      $region15: #{feature_downscale.1} parent=11 // pred_region
        _
      $region16: #{feature_downscale.1} parent=11 // pred_fallthru
        _
      // Predicated region
      $region17: #{feature_downscale.1} parent=11 // pred_check
        %p181 = pneg %p93
      $region18: #{feature_downscale.1} parent=11 // pred_check_branch
        %183 = sbr.rel (%p181) target = $region20
      $region19: #{feature_downscale.1} parent=11 // pred_region
        _
      $region20: #{feature_downscale.1} parent=11 // pred_fallthru
        _
      // Predicated region
      $region21: #{feature_downscale.1} parent=11 // pred_check
        %p184 = pneg %p114
      $region22: #{feature_downscale.1} parent=11 // pred_check_branch
        %186 = sbr.rel (%p184) target = $region24
      $region23: #{feature_downscale.1} parent=11 // pred_region
        _
      $region24: #{feature_downscale.1} parent=11 // pred_fallthru
        _
      // Predicated region
      $region25: #{feature_downscale.1} parent=11 // pred_check
        %p187 = pneg %p135
      $region26: #{feature_downscale.1} parent=11 // pred_check_branch
        %189 = sbr.rel (%p187) target = $region28
      $region27: #{feature_downscale.1} parent=11 // pred_region
        _
      $region28: #{feature_downscale.1} parent=11 // pred_fallthru
        _
    $region12: #{feature_downscale.1} parent=5 // pred_fallthru
      _
    %p190 = scmp.lt.s32.totalorder %s11, 2
    // Predicated region
    $region29: #{feature_downscale.1} parent=5 // pred_check
      %p191 = pneg %p190
    $region30: #{feature_downscale.1} parent=5 // pred_check_branch
      %193 = sbr.rel (%p191) target = $region32
    $region31: #{feature_downscale.1} parent=5 // pred_region
      // Predicated region
      $region33: #{feature_downscale.1} parent=31 // pred_check
        %p194 = pneg %p45
      $region34: #{feature_downscale.1} parent=31 // pred_check_branch
        %196 = sbr.rel (%p194) target = $region36
      $region35: #{feature_downscale.1} parent=31 // pred_region
        %p197 = scmp.lt.s32.totalorder %s18, 1
        %s198 = scalar_select %p197, %s18, 1
        %p199 = scmp.lt.s32.totalorder %s19, 0
        %s200 = scalar_select %p199, %s19, 0
        %s201 = smul.addr %s198, 2
        %s202 = sadd.s32 %s200, %s201
        %s203 = smul.addr %s202, 8
        %s204 = scalar_lea.vmem %s0, %s203
      $region36: #{feature_downscale.1} parent=31 // pred_fallthru
        _
    $region32: #{feature_downscale.1} parent=5 // pred_fallthru
      _
    %p205 = scmp.le.s32.totalorder 1, %s11
    %p206 = scmp.lt.s32.totalorder %s11, 3
    %p207 = pnand %p205, %p206
    %p208 = pneg %p207
    // Predicated region
    $region37: #{feature_downscale.1} parent=5 // pred_check
      _
    $region38: #{feature_downscale.1} parent=5 // pred_check_branch
      %210 = sbr.rel (%p207) target = $region40
    $region39: #{feature_downscale.1} parent=5 // pred_region
      %s211 = ssub.s32 %s11, 1
      %p212 = scmp.lt.s32.totalorder %s20, 1
      %s213 = scalar_select %p212, %s20, 1
      %p214 = scmp.lt.s32.totalorder %s21, 0
      %s215 = scalar_select %p214, %s21, 0
      %s216 = smul.addr %s213, 2
      %s217 = sadd.s32 %s215, %s216
      %s218 = smul.addr %s217, 8
      %s219 = scalar_lea.vmem %s0, %s218
      %p220 = pneg %p51
      %p221 = pneg %p48
      %p222 = pneg %p72
      %p223 = pneg %p69
      %p224 = pneg %p93
      %p225 = pneg %p90
      %p226 = pneg %p114
      %p227 = pneg %p111
      %p228 = pneg %p135
      %p229 = pneg %p132
      %p230 = pneg %p163
      %p231 = pneg %p160
      %p232 = scmp.lt.s32.totalorder %s20, 1
      %s233 = scalar_select %p232, %s20, 1
      %p234 = scmp.lt.s32.totalorder %s21, 0
      %s235 = scalar_select %p234, %s21, 0
      %s236 = sadd.s32 %s235, %s233
      %s237 = smul.addr %s236, 4
      %s238 = scalar_lea.vmem %s5, %s237
      %p239 = scmp.lt.s32.totalorder %s20, 1
      %s240 = scalar_select %p239, %s20, 1
      %p241 = scmp.lt.s32.totalorder %s21, 0
      %s242 = scalar_select %p241, %s21, 0
      %s243 = smul.addr %s240, 2
      %s244 = sadd.s32 %s242, %s243
      %s245 = smul.addr %s244, 8
      %s246 = scalar_lea.vmem %s0, %s245
      %p247 = scmp.lt.s32.totalorder %s20, 1
      %s248 = scalar_select %p247, %s20, 1
      %p249 = scmp.lt.s32.totalorder %s21, 0
      %s250 = scalar_select %p249, %s21, 0
      %s251 = sadd.s32 %s250, %s248
      %s252 = smul.addr %s251, 4
      %s253 = scalar_lea.vmem %s5, %s252
      %v254 = vld [vmem:[%s1] sm:$0xf]
      %v255 = vld [vmem:[%s246] sm:$0xff]
      %v256 = vld [vmem:[%s246 + $0x8] sm:$0xff]
      %v257 = vld [vmem:[%s2] sm:$0xf]
      %259 = vset.pattern.permute.xlu0 0
      %260 = vperm.xlu0 %259, %v257
      %v261 = vpop.permute.xlu0 %260
      %vm263 = vcmask 130048
      %v265 = vsel %vm263, %v254, 0
      %267 = vmatprep.subr.mxu0 0.0
      %268 = vmatpush1.msra.mxu0 0.0
      %269 = vmatprep.subr.mxu0 0.0
      %270 = vmatpush1.msra.mxu0 0.0
      %271 = vmatprep.subr.mxu0 0.0
      %272 = vmatpush1.msra.mxu0 0.0
      %273 = vmatprep.subr.mxu0 0.0
      %274 = vmatpush1.msra.mxu0 0.0
      %275 = vmatprep.subr.mxu0 0.0
      %276 = vmatpush1.msra.mxu0 0.0
      %277 = vmatprep.subr.mxu0 0.0
      %278 = vmatpush1.msra.mxu0 0.0
      %279 = vmatprep.subr.mxu0 0.0
      %280 = vmatpush1.msra.mxu0 0.0
      %281 = vmatprep.subr.mxu0 0.0
      %282 = vmatpush1.msra.mxu0 0.0
      %283 = vmatprep.subr.mxu0 0.0
      %284 = vmatpush1.msra.mxu0 0.0
      %285 = vmatprep.subr.mxu0 0.0
      %286 = vmatpush1.msra.mxu0 0.0
      %287 = vmatprep.subr.mxu0 0.0
      %288 = vmatpush1.msra.mxu0 0.0
      %289 = vmatprep.subr.mxu0 0.0
      %290 = vmatpush1.msra.mxu0 0.0
      %291 = vmatprep.subr.mxu0 0.0
      %292 = vmatpush1.msra.mxu0 0.0
      %293 = vmatprep.subr.mxu0 0.0
      %294 = vmatpush1.msra.mxu0 0.0
      %295 = vmatprep.subr.mxu0 0.0
      %296 = vmatpush1.msra.mxu0 %v256
      %297 = vmatprep.subr.mxu0 0.0
      %298 = vmatpush1.msra.mxu0 %v255
      %299 = vmatprep.subr.mxu0 0.0
      %300 = vmatpush2.msra.mxu0 0.0
      %301 = vmatprep.subr.mxu0 0.0
      %302 = vmatpush2.msra.mxu0 0.0
      %303 = vmatprep.subr.mxu0 0.0
      %304 = vmatpush2.msra.mxu0 0.0
      %305 = vmatprep.subr.mxu0 0.0
      %306 = vmatpush2.msra.mxu0 0.0
      %307 = vmatprep.subr.mxu0 0.0
      %308 = vmatpush2.msra.mxu0 0.0
      %309 = vmatprep.subr.mxu0 0.0
      %310 = vmatpush2.msra.mxu0 0.0
      %311 = vmatprep.subr.mxu0 0.0
      %312 = vmatpush2.msra.mxu0 0.0
      %313 = vmatprep.subr.mxu0 0.0
      %314 = vmatpush2.msra.mxu0 0.0
      %315 = vmatprep.subr.mxu0 0.0
      %316 = vmatpush2.msra.mxu0 0.0
      %317 = vmatprep.subr.mxu0 0.0
      %318 = vmatpush2.msra.mxu0 0.0
      %319 = vmatprep.subr.mxu0 0.0
      %320 = vmatpush2.msra.mxu0 0.0
      %321 = vmatprep.subr.mxu0 0.0
      %322 = vmatpush2.msra.mxu0 0.0
      %323 = vmatprep.subr.mxu0 0.0
      %324 = vmatpush2.msra.mxu0 0.0
      %325 = vmatprep.subr.mxu0 0.0
      %326 = vmatpush2.msra.mxu0 0.0
      %327 = vmatprep.subr.mxu0 0.0
      %328 = vmatpush2.msra.mxu0 0.0
      %329 = vmatprep.subr.mxu0 0.0
      %330 = vmatpush2.msra.mxu0 0.0
      %331 = vmatprep.mubr.f32.mxu0 0.0
      %332 = vmatmul.mubr.f32.gmra.mxu0 %v265
      %v333 = vpop.f32.mrf.mxu0
      %v334 = vadd.f32 %v261, %v333
      %v335 = vpop.f32.mrf.mxu0
      %336 = vdwg.mxu0
      %vm337 = vcmask 519168
      %v338 = vsel %vm337, %v334, 0.0
      %v339 = vrot.slane %v338, 4
      %v340 = vadd.f32 %v338, %v339
      %v341 = vrot.slane %v340, 2
      %v342 = vadd.f32 %v340, %v341
      %v343 = vrot.slane %v342, 1
      %v344 = vadd.f32 %v342, %v343
      %v345 = vrcp.pop 4.0
      %v346 = vmul.f32 %v344, %v345
      %v347 = vsub.f32 %v334, %v346
      %v348 = vmul.f32 %v347, %v347
      %v349 = vsel %vm337, %v348, 0.0
      %v350 = vrot.slane %v349, 4
      %v351 = vadd.f32 %v349, %v350
      %v352 = vrot.slane %v351, 2
      %v353 = vadd.f32 %v351, %v352
      %v354 = vrot.slane %v353, 1
      %v355 = vadd.f32 %v353, %v354
      %v356 = vmul.f32 %v355, %v345
      %v357 = vadd.f32 %v356, 1e-05
      %v358 = vrsqrt.pop %v357
      %v359 = vmul.f32 %v347, %v358
      %v360 = vld [vmem:[%s3] sm:$0xf]
      %v361 = vld [vmem:[%s4] sm:$0xf]
      %363 = vset.pattern.permute.xlu0 0
      %364 = vperm.xlu0 %363, %v360
      %v365 = vpop.permute.xlu0 %364
      %v367 = vmul.f32 %v359, %v365
      %369 = vset.pattern.permute.xlu0 0
      %370 = vperm.xlu0 %369, %v361
      %v371 = vpop.permute.xlu0 %370
      %v373 = vadd.f32 %v367, %v371
      %374 = vst.msk [vmem:[%s253] sm:$0xf] %vm337, %v373
      %p375 = scmp.lt.s32.totalorder %s20, 1
      %s376 = scalar_select %p375, %s20, 1
      %p377 = scmp.lt.s32.totalorder %s21, 0
      %s378 = scalar_select %p377, %s21, 0
      %s379 = sadd.s32 %s378, %s376
      %s380 = smul.addr %s379, 4
      %s381 = scalar_lea.vmem %s5, %s380
      // Predicated region
      $region41: #{feature_downscale.1} parent=39 // pred_check
        %p382 = pneg %p160
      $region42: #{feature_downscale.1} parent=39 // pred_check_branch
        %384 = sbr.rel (%p382) target = $region44
      $region43: #{feature_downscale.1} parent=39 // pred_region
        _
      $region44: #{feature_downscale.1} parent=39 // pred_fallthru
        _
    $region40: #{feature_downscale.1} parent=5 // pred_fallthru
      _
    %p385 = scmp.le.s32.totalorder 2, %s11
    // Predicated region
    $region45: #{feature_downscale.1} parent=5 // pred_check
      %p386 = pneg %p385
    $region46: #{feature_downscale.1} parent=5 // pred_check_branch
      %388 = sbr.rel (%p386) target = $region48
    $region47: #{feature_downscale.1} parent=5 // pred_region
      %s389 = ssub.s32 %s11, 2
      // Predicated region
      $region49: #{feature_downscale.1} parent=47 // pred_check
        %p390 = pneg %p166
      $region50: #{feature_downscale.1} parent=47 // pred_check_branch
        %392 = sbr.rel (%p390) target = $region52
      $region51: #{feature_downscale.1} parent=47 // pred_region
        %p393 = scmp.lt.s32.totalorder %s22, 1
        %s394 = scalar_select %p393, %s22, 1
        %p395 = scmp.lt.s32.totalorder %s23, 0
        %s396 = scalar_select %p395, %s23, 0
        %s397 = sadd.s32 %s396, %s394
        %s398 = smul.addr %s397, 4
        %s399 = scalar_lea.vmem %s5, %s398
      $region52: #{feature_downscale.1} parent=47 // pred_fallthru
        _
    $region48: #{feature_downscale.1} parent=5 // pred_fallthru
      _
  $region6: #{feature_downscale.1} parent=0 // loop_footer
    %s15 = sadd.s32 1, %s11
  $region7: #{feature_downscale.1} parent=0 // loop_footer_branch
    %10 = sbr.rel target = $region3
  $region8: #{feature_downscale.1} parent=0 // loop_exit
    _

</llo_original>
